<compile_context>
chip_gen: v7x
topology: tpu7x:2x2x1
jax: 0.10.0
libtpu: 0.0.40
codegen_flags: <defaults>
</compile_context>

<pallas_src>
from functools import partial
import math

import jax
import jax.numpy as jnp
from jax.experimental import pallas as pl
from jax.experimental.pallas import tpu as pltpu

F32_EPS = float(jnp.finfo(jnp.float32).eps)

_MAX_C_TILE = 256            # channel rows per block (multiple of 32: ok for all dtypes)
_MAX_HW_TILE = 2048          # lanes per block
_BLOCK_BYTES = 4 * 1024 * 1024   # target per-step input block size (native dtype bytes)
_MAX_UNROLL = 64             # cap on pre_tile * lane-chunks unrolled per channel group
_SPLIT_MIN_ELEMS = 1 << 20   # split channel axis into >=2 parallel tiles (v7x: 2 TCs)
_ACC_LANES = 128             # running-accumulator lane width (one vreg row)


def _round_up(a, b):
    return ((a + b - 1) // b) * b


def _largest_divisor_leq(n, cap):
    for d in range(min(n, cap), 0, -1):
        if n % d == 0:
            return d
    return 1


def _sublane_multiple(itemsize):
    # Valid second-minor block multiple per dtype width.
    return {4: 8, 2: 16, 1: 32}.get(itemsize, 8)


def _vmem_limit_bytes():
    # Generation-aware scoped-VMEM budget (v7x has 64 MiB physical vs 128 MiB).
    limit = 32 * 1024 * 1024
    try:
        cap = getattr(pltpu.get_tpu_info(), "vmem_capacity_bytes", None)
        if cap:
            limit = min(limit, max(cap // 2, 16 * 1024 * 1024))
    except Exception:
        pass
    return limit


# ---------------------------------------------------------------------------
# Pallas kernel: per-channel min/max over (pre, hw) reduction axes.
# ---------------------------------------------------------------------------
def _accumulate_chunks(x_ref, acc_min_ref, acc_max_ref, *, pre_tile, c_tile,
                       acc_lanes, n_chunks, valid_lanes, acc_dtype, c_sub):
    """Fold one (pre_tile, c_tile, hw_tile) input block into the (c_tile, acc_lanes)
    running min/max accumulators.  Pure VPU work; one accumulator read-modify-write
    per channel group per grid step (keeps vector-store slot pressure tiny)."""
    for c0 in range(0, c_tile, c_sub):
        cs = min(c_sub, c_tile - c0)
        fold_min = None
        fold_max = None
        for p in range(pre_tile):
            for k in range(n_chunks):
                start = k * acc_lanes
                if start >= valid_lanes:
                    continue                      # chunk fully past the ragged edge
                chunk = x_ref[p, c0:c0 + cs, start:start + acc_lanes].astype(acc_dtype)
                if start + acc_lanes > valid_lanes:
                    lane = jax.lax.broadcasted_iota(jnp.int32, chunk.shape, 1)
                    ok = lane < (valid_lanes - start)
                    cmin = jnp.where(ok, chunk, jnp.inf)
                    cmax = jnp.where(ok, chunk, -jnp.inf)
                else:
                    cmin = chunk
                    cmax = chunk
                fold_min = cmin if fold_min is None else jnp.minimum(fold_min, cmin)
                fold_max = cmax if fold_max is None else jnp.maximum(fold_max, cmax)
        acc_min_ref[c0:c0 + cs, :] = jnp.minimum(acc_min_ref[c0:c0 + cs, :], fold_min)
        acc_max_ref[c0:c0 + cs, :] = jnp.maximum(acc_max_ref[c0:c0 + cs, :], fold_max)


def _minmax_kernel(x_ref, prev_min_ref, prev_max_ref, min_ref, max_ref,
                   acc_min_ref, acc_max_ref, *,
                   pre_tile, c_tile, hw_tile, acc_lanes, tail_valid_lanes,
                   acc_dtype, c_sub):
    ni = pl.program_id(1)            # pre-axis reduction step
    hi = pl.program_id(2)            # lane-axis reduction step
    n_pre = pl.num_programs(1)
    n_hw = pl.num_programs(2)

    is_first = jnp.logical_and(ni == 0, hi == 0)
    is_last = jnp.logical_and(ni == n_pre - 1, hi == n_hw - 1)

    # (Re)initialize the accumulators at the start of every reduction sweep
    # (the channel grid axis is outermost, so this fires once per channel tile).
    @pl.when(is_first)
    def _init():
        acc_min_ref[...] = jnp.full(acc_min_ref.shape, jnp.inf, acc_dtype)
        acc_max_ref[...] = jnp.full(acc_max_ref.shape, -jnp.inf, acc_dtype)

    n_chunks = hw_tile // acc_lanes
    accum = partial(_accumulate_chunks, x_ref, acc_min_ref, acc_max_ref,
                    pre_tile=pre_tile, c_tile=c_tile, acc_lanes=acc_lanes,
                    n_chunks=n_chunks, acc_dtype=acc_dtype, c_sub=c_sub)

    if tail_valid_lanes == hw_tile:
        accum(valid_lanes=hw_tile)
    else:
        # Only the final lane tile is ragged; interior tiles skip the mask entirely.
        @pl.when(hi < n_hw - 1)
        def _interior():
            accum(valid_lanes=hw_tile)

        @pl.when(hi == n_hw - 1)
        def _tail():
            accum(valid_lanes=tail_valid_lanes)

    # Finalize once per channel tile: cross-lane reduce (XLU) + fuse the running
    # stats from previous forward() calls.
    @pl.when(is_last)
    def _finalize():
        row_min = jnp.min(acc_min_ref[...], axis=1, keepdims=True).astype(jnp.float32)
        row_max = jnp.max(acc_max_ref[...], axis=1, keepdims=True).astype(jnp.float32)
        min_ref[...] = jnp.minimum(row_min, prev_min_ref[...])
        max_ref[...] = jnp.maximum(row_max, prev_max_ref[...])


def _minmax_per_channel(x3d: jax.Array, prev_min: jax.Array, prev_max: jax.Array):
    """x3d: (pre, C, post) in its native dtype (channel axis in the middle).
    prev_min/prev_max: (C,) float32 running stats (+/-inf sentinels on first call).
    Returns updated float32 (min, max), each of shape (C,)."""
    pre, C, HW = x3d.shape
    dtype = x3d.dtype
    itemsize = jnp.dtype(dtype).itemsize
    # min/max is exact in the native float dtype -> accumulate natively (halves
    # ld/st/VALU pressure for bf16 on v6e/v7x); integers go through f32.
    # TODO(synk): integer inputs wider than ~24 bits lose precision in the f32 cast.
    acc_dtype = dtype if jnp.issubdtype(dtype, jnp.floating) else jnp.float32
    sub = _sublane_multiple(itemsize)

    # ---- lane (hw) tiling: full dim if <=128, else balanced multiples of 128 ----
    if HW <= 128:
        hw_tile = HW
        acc_lanes = HW
    else:
        n_h = pl.cdiv(HW, _MAX_HW_TILE)
        hw_tile = _round_up(pl.cdiv(HW, n_h), 128)
        hw_tile = min(hw_tile, 128 * (HW // 128))   # never exceed the array dim
        acc_lanes = _ACC_LANES
    hw_tiles = pl.cdiv(HW, hw_tile)
    tail_valid_lanes = HW - (hw_tiles - 1) * hw_tile   # == hw_tile when exact

    # ---- channel (sublane) tiling ----
    if C <= _MAX_C_TILE:
        c_tile = C
        # Keep >= 2 blocks on the "parallel" channel axis when there is enough
        # work to amortize the extra grid steps, so both TensorCores of a v7x
        # chip stay busy (work-neutral on 1-TC v5e/v6e).
        if C >= 2 * sub and pre * C * HW >= _SPLIT_MIN_ELEMS:
            c_tile = _round_up(pl.cdiv(C, 2), sub)
    else:
        c_tile = _MAX_C_TILE
    c_tiles = pl.cdiv(C, c_tile)

    # ---- pre packing: merge batch slabs into one block when c/hw blocks are small ----
    n_chunks = max(1, hw_tile // acc_lanes)
    budget_elems = max(1, _BLOCK_BYTES // itemsize)
    pre_cap = max(1, min(budget_elems // (c_tile * hw_tile), _MAX_UNROLL // n_chunks))
    pre_tile = _largest_divisor_leq(pre, pre_cap)   # exact divisor: no pre masking
    pre_tiles = pre // pre_tile

    c_sub = min(c_tile, 8 * sub)   # channel rows folded in vregs per chunk

    kernel = partial(_minmax_kernel,
                     pre_tile=pre_tile, c_tile=c_tile, hw_tile=hw_tile,
                     acc_lanes=acc_lanes, tail_valid_lanes=tail_valid_lanes,
                     acc_dtype=acc_dtype, c_sub=c_sub)

    cost = pl.CostEstimate(
        flops=2 * int(x3d.size),
        transcendentals=0,
        bytes_accessed=int(x3d.size) * itemsize + 4 * C * 4,
    )

    out_shape = (
        jax.ShapeDtypeStruct((C, 1), jnp.float32),
        jax.ShapeDtypeStruct((C, 1), jnp.float32),
    )

    # NOTE: when C % c_tile != 0 the padded rows of partial blocks carry unmasked
    # garbage through the accumulators. This is safe because per-channel rows
    # never mix and the partial output store drops the padded rows -- do not add
    # any cross-row reduction or lane-dense output repack without masking them.
    mins, maxs = pl.pallas_call(
        kernel,
        out_shape=out_shape,
        grid_spec=pltpu.PrefetchScalarGridSpec(
            num_scalar_prefetch=0,
            grid=(c_tiles, pre_tiles, hw_tiles),
            in_specs=[
                pl.BlockSpec((pre_tile, c_tile, hw_tile),
                             lambda ci, ni, hi: (ni, ci, hi)),
                pl.BlockSpec((c_tile, 1), lambda ci, ni, hi: (ci, 0)),
                pl.BlockSpec((c_tile, 1), lambda ci, ni, hi: (ci, 0)),
            ],
            out_specs=[
                pl.BlockSpec((c_tile, 1), lambda ci, ni, hi: (ci, 0)),
                pl.BlockSpec((c_tile, 1), lambda ci, ni, hi: (ci, 0)),
            ],
            scratch_shapes=[
                pltpu.VMEM((c_tile, acc_lanes), acc_dtype),
                pltpu.VMEM((c_tile, acc_lanes), acc_dtype),
            ],
        ),
        compiler_params=pltpu.CompilerParams(
            dimension_semantics=("parallel", "arbitrary", "arbitrary"),
            vmem_limit_bytes=_vmem_limit_bytes(),
        ),
        cost_estimate=cost,
    )(x3d,
      prev_min.reshape(C, 1).astype(jnp.float32),
      prev_max.reshape(C, 1).astype(jnp.float32))
    return mins[:, 0], maxs[:, 0]


# ---------------------------------------------------------------------------
# Observer "module" (plain-Python state; mirrors the torch observer semantics)
# ---------------------------------------------------------------------------
class AffineQuantizedMinMaxObserver:
    """Concrete AffineQuantizedObserverBase: ASYMMETRIC mapping, int8 target,
    PerAxis(axis=1 / channel) granularity, ZeroPointDomain.INT, preserve_zero."""

    def __init__(self, quant_min: int = -128, quant_max: int = 127,
                 eps: float = F32_EPS, axis: int = 1):
        self.quant_min = quant_min
        self.quant_max = quant_max
        self.eps = eps
        self.axis = axis
        self.min_val = None   # running per-channel stats (float32, shape (C,))
        self.max_val = None

    def forward(self, x: jax.Array) -> jax.Array:
        axis = self.axis % x.ndim
        C = x.shape[axis]
        pre = math.prod(x.shape[:axis])
        post = math.prod(x.shape[axis + 1:])

        # Contiguous merge around the channel axis: no HBM transpose, no upcast.
        x3d = x.reshape(pre, C, post)

        if self.min_val is None:
            prev_min = jnp.full((C,), jnp.inf, jnp.float32)
            prev_max = jnp.full((C,), -jnp.inf, jnp.float32)
        else:
            prev_min, prev_max = self.min_val, self.max_val

        # Running-stat update is fused into the kernel's finalize step.
        self.min_val, self.max_val = _minmax_per_channel(x3d, prev_min, prev_max)

        # Observer contract: return the original input unchanged.
        return x

    def calculate_qparams(self):
        assert self.min_val is not None, "forward() must be called first"
        # ASYMMETRIC + preserve_zero=True + ZeroPointDomain.INT
        min_neg = jnp.minimum(self.min_val, 0.0)
        max_pos = jnp.maximum(self.max_val, 0.0)
        scale = (max_pos - min_neg) / float(self.quant_max - self.quant_min)
        scale = jnp.maximum(scale, self.eps)
        zero_point = self.quant_min - jnp.round(min_neg / scale)
        zero_point = jnp.clip(zero_point, self.quant_min, self.quant_max)
        return scale.astype(jnp.float32), zero_point.astype(jnp.int32)


if __name__ == "__main__":
    key = jax.random.PRNGKey(0)
    # Small NCHW activation: batch=2, channels=4, spatial=16x16
    x = jax.random.normal(key, (2, 4, 16, 16), dtype=jnp.float32)

    obs = AffineQuantizedMinMaxObserver()
    y = obs.forward(x)
    scale, zero_point = obs.calculate_qparams()
    jax.block_until_ready((y, scale, zero_point))

    # --- correctness vs. plain-JAX reference ---
    ref_min = jnp.min(x, axis=(0, 2, 3))
    ref_max = jnp.max(x, axis=(0, 2, 3))
    assert jnp.allclose(obs.min_val, ref_min, atol=1e-6), "min mismatch"
    assert jnp.allclose(obs.max_val, ref_max, atol=1e-6), "max mismatch"
    assert jnp.allclose(y, x), "forward must return input unchanged"

    ref_scale = jnp.maximum(
        (jnp.maximum(ref_max, 0.0) - jnp.minimum(ref_min, 0.0)) / 255.0, F32_EPS
    )
    ref_zp = jnp.clip(-128 - jnp.round(jnp.minimum(ref_min, 0.0) / ref_scale), -128, 127)
    assert jnp.allclose(scale, ref_scale, rtol=1e-6), "scale mismatch"
    assert jnp.allclose(zero_point.astype(jnp.float32), ref_zp), "zero_point mismatch"

    # --- ragged lane path (HW=200 -> 128-lane tiles + masked tail tile only) ---
    x2 = jax.random.normal(jax.random.PRNGKey(1), (2, 4, 10, 20), jnp.float32) * 3.0
    inf4 = jnp.full((4,), jnp.inf, jnp.float32)
    m2, M2 = _minmax_per_channel(x2.reshape(2, 4, 200), inf4, -inf4)
    assert jnp.allclose(m2, jnp.min(x2, axis=(0, 2, 3)), atol=1e-6), "masked min mismatch"
    assert jnp.allclose(M2, jnp.max(x2, axis=(0, 2, 3)), atol=1e-6), "masked max mismatch"

    # --- running-stat update (fused into the kernel) across a second forward() ---
    obs.forward(x2)
    run_min = jnp.minimum(ref_min, jnp.min(x2, axis=(0, 2, 3)))
    run_max = jnp.maximum(ref_max, jnp.max(x2, axis=(0, 2, 3)))
    assert jnp.allclose(obs.min_val, run_min, atol=1e-6), "running min mismatch"
    assert jnp.allclose(obs.max_val, run_max, atol=1e-6), "running max mismatch"

    # --- native bf16 accumulation path (no f32 upcast of the stream) ---
    x3 = jax.random.normal(jax.random.PRNGKey(2), (2, 16, 16, 16), jnp.bfloat16)
    obs_bf16 = AffineQuantizedMinMaxObserver()
    obs_bf16.forward(x3)
    x3_f32 = x3.astype(jnp.float32)
    assert jnp.allclose(obs_bf16.min_val, jnp.min(x3_f32, axis=(0, 2, 3))), "bf16 min"
    assert jnp.allclose(obs_bf16.max_val, jnp.max(x3_f32, axis=(0, 2, 3))), "bf16 max"

    # --- larger input: channel axis split into >=2 parallel tiles (v7x 2 cores) ---
    x4 = jax.random.normal(jax.random.PRNGKey(3), (4, 64, 64, 64), jnp.float32)
    obs4 = AffineQuantizedMinMaxObserver()
    obs4.forward(x4)
    assert jnp.allclose(obs4.min_val, jnp.min(x4, axis=(0, 2, 3)), atol=1e-6), "split min"
    assert jnp.allclose(obs4.max_val, jnp.max(x4, axis=(0, 2, 3)), atol=1e-6), "split max"

    # --- C > 256: partial channel tile (padded rows masked on the output store) ---
    x5 = jax.random.normal(jax.random.PRNGKey(4), (1, 272, 100), jnp.float32)
    inf272 = jnp.full((272,), jnp.inf, jnp.float32)
    m5, M5 = _minmax_per_channel(x5, inf272, -inf272)
    assert jnp.allclose(m5, jnp.min(x5, axis=(0, 2)), atol=1e-6), "partial-C min mismatch"
    assert jnp.allclose(M5, jnp.max(x5, axis=(0, 2)), atol=1e-6), "partial-C max mismatch"

    jax.block_until_ready((obs.min_val, obs.max_val, obs_bf16.min_val,
                           obs4.min_val, obs4.max_val, m5, M5))
    print("KERNEL_OK")
</pallas_src>

<mosaic_0001>
module attributes {stable_mosaic.version = 11 : i64} {
  func.func @_minmax_kernel(%arg0: i32, %arg1: i32, %arg2: i32, %arg3: memref<2x4x256xf32, #tpu.memory_space<vmem>>, %arg4: memref<4x1xf32, #tpu.memory_space<vmem>>, %arg5: memref<4x1xf32, #tpu.memory_space<vmem>>, %arg6: memref<4x1xf32, #tpu.memory_space<vmem>>, %arg7: memref<4x1xf32, #tpu.memory_space<vmem>>, %arg8: memref<4x128xf32, #tpu.memory_space<vmem>>, %arg9: memref<4x128xf32, #tpu.memory_space<vmem>>) attributes {dimension_semantics = [#tpu.dimension_semantics<parallel>, #tpu.dimension_semantics<arbitrary>, #tpu.dimension_semantics<arbitrary>], iteration_bounds = array<i64: 1, 1, 1>, scalar_prefetch = 0 : i64, scratch_operands = 2 : i64, tpu.core_type = #tpu.core_type<tc>, window_params = [{transform_indices = @transform_0, window_bounds = array<i64: 2, 4, 256>}, {transform_indices = @transform_1, window_bounds = array<i64: 4, 1>}, {transform_indices = @transform_2, window_bounds = array<i64: 4, 1>}, {transform_indices = @transform_3, window_bounds = array<i64: 4, 1>}, {transform_indices = @transform_4, window_bounds = array<i64: 4, 1>}]} {
    %c0_i32 = arith.constant 0 : i32
    %0 = arith.cmpi eq, %arg1, %c0_i32 : i32
    %c0_i32_0 = arith.constant 0 : i32
    %1 = arith.cmpi eq, %arg2, %c0_i32_0 : i32
    %2 = arith.andi %0, %1 : i1
    %c0_i32_1 = arith.constant 0 : i32
    %3 = arith.cmpi eq, %arg1, %c0_i32_1 : i32
    %c0_i32_2 = arith.constant 0 : i32
    %4 = arith.cmpi eq, %arg2, %c0_i32_2 : i32
    %5 = arith.andi %3, %4 : i1
    %6 = arith.extui %2 : i1 to i32
    %c0_i32_3 = arith.constant 0 : i32
    %7 = arith.cmpi ne, %6, %c0_i32_3 : i32
    scf.if %7 {
      %cst = arith.constant 0x7F800000 : f32
      %30 = vector.broadcast %cst : f32 to vector<4x128xf32>
      %c0_22 = arith.constant 0 : index
      %c0_23 = arith.constant 0 : index
      %31 = vector.load %arg8[%c0_22, %c0_23] : memref<4x128xf32, #tpu.memory_space<vmem>>, vector<4x128xf32>
      tpu.vector_store %arg8[%c0_22, %c0_23], %30 {strides = array<i32>} : memref<4x128xf32, #tpu.memory_space<vmem>>, vector<4x128xf32>,
      %cst_24 = arith.constant 0xFF800000 : f32
      %32 = vector.broadcast %cst_24 : f32 to vector<4x128xf32>
      %c0_25 = arith.constant 0 : index
      %c0_26 = arith.constant 0 : index
      %33 = vector.load %arg9[%c0_25, %c0_26] : memref<4x128xf32, #tpu.memory_space<vmem>>, vector<4x128xf32>
      tpu.vector_store %arg9[%c0_25, %c0_26], %32 {strides = array<i32>} : memref<4x128xf32, #tpu.memory_space<vmem>>, vector<4x128xf32>,
    } else {
    }
    %c0 = arith.constant 0 : index
    %c0_4 = arith.constant 0 : index
    %c0_5 = arith.constant 0 : index
    %8 = vector.load %arg3[%c0, %c0_4, %c0_5] : memref<2x4x256xf32, #tpu.memory_space<vmem>>, vector<1x4x128xf32>
    %9 = vector.shape_cast %8 : vector<1x4x128xf32> to vector<4x128xf32>
    %c0_6 = arith.constant 0 : index
    %c0_7 = arith.constant 0 : index
    %c128 = arith.constant 128 : index
    %10 = vector.load %arg3[%c0_6, %c0_7, %c128] : memref<2x4x256xf32, #tpu.memory_space<vmem>>, vector<1x4x128xf32>
    %11 = vector.shape_cast %10 : vector<1x4x128xf32> to vector<4x128xf32>
    %12 = arith.minimumf %9, %11 : vector<4x128xf32>
    %13 = arith.maximumf %9, %11 : vector<4x128xf32>
    %c1 = arith.constant 1 : index
    %c0_8 = arith.constant 0 : index
    %c0_9 = arith.constant 0 : index
    %14 = vector.load %arg3[%c1, %c0_8, %c0_9] : memref<2x4x256xf32, #tpu.memory_space<vmem>>, vector<1x4x128xf32>
    %15 = vector.shape_cast %14 : vector<1x4x128xf32> to vector<4x128xf32>
    %16 = arith.minimumf %12, %15 : vector<4x128xf32>
    %17 = arith.maximumf %13, %15 : vector<4x128xf32>
    %c1_10 = arith.constant 1 : index
    %c0_11 = arith.constant 0 : index
    %c128_12 = arith.constant 128 : index
    %18 = vector.load %arg3[%c1_10, %c0_11, %c128_12] : memref<2x4x256xf32, #tpu.memory_space<vmem>>, vector<1x4x128xf32>
    %19 = vector.shape_cast %18 : vector<1x4x128xf32> to vector<4x128xf32>
    %20 = arith.minimumf %16, %19 : vector<4x128xf32>
    %21 = arith.maximumf %17, %19 : vector<4x128xf32>
    %c0_13 = arith.constant 0 : index
    %c0_14 = arith.constant 0 : index
    %22 = vector.load %arg8[%c0_13, %c0_14] : memref<4x128xf32, #tpu.memory_space<vmem>>, vector<4x128xf32>
    %23 = arith.minimumf %22, %20 : vector<4x128xf32>
    %c0_15 = arith.constant 0 : index
    %c0_16 = arith.constant 0 : index
    %24 = vector.load %arg8[%c0_15, %c0_16] : memref<4x128xf32, #tpu.memory_space<vmem>>, vector<4x128xf32>
    tpu.vector_store %arg8[%c0_15, %c0_16], %23 {strides = array<i32>} : memref<4x128xf32, #tpu.memory_space<vmem>>, vector<4x128xf32>,
    %c0_17 = arith.constant 0 : index
    %c0_18 = arith.constant 0 : index
    %25 = vector.load %arg9[%c0_17, %c0_18] : memref<4x128xf32, #tpu.memory_space<vmem>>, vector<4x128xf32>
    %26 = arith.maximumf %25, %21 : vector<4x128xf32>
    %c0_19 = arith.constant 0 : index
    %c0_20 = arith.constant 0 : index
    %27 = vector.load %arg9[%c0_19, %c0_20] : memref<4x128xf32, #tpu.memory_space<vmem>>, vector<4x128xf32>
    tpu.vector_store %arg9[%c0_19, %c0_20], %26 {strides = array<i32>} : memref<4x128xf32, #tpu.memory_space<vmem>>, vector<4x128xf32>,
    %28 = arith.extui %5 : i1 to i32
    %c0_i32_21 = arith.constant 0 : i32
    %29 = arith.cmpi ne, %28, %c0_i32_21 : i32
    scf.if %29 {
      %c0_22 = arith.constant 0 : index
      %c0_23 = arith.constant 0 : index
      %30 = vector.load %arg8[%c0_22, %c0_23] : memref<4x128xf32, #tpu.memory_space<vmem>>, vector<4x128xf32>
      %cst = arith.constant dense<0x7F800000> : vector<4xf32>
      %31 = vector.multi_reduction <minimumf>, %30, %cst [1] : vector<4x128xf32> to vector<4xf32>
      %32 = vector.shape_cast %31 : vector<4xf32> to vector<4x1xf32>
      %c0_24 = arith.constant 0 : index
      %c0_25 = arith.constant 0 : index
      %33 = vector.load %arg9[%c0_24, %c0_25] : memref<4x128xf32, #tpu.memory_space<vmem>>, vector<4x128xf32>
      %cst_26 = arith.constant dense<0xFF800000> : vector<4xf32>
      %34 = vector.multi_reduction <maximumf>, %33, %cst_26 [1] : vector<4x128xf32> to vector<4xf32>
      %35 = vector.shape_cast %34 : vector<4xf32> to vector<4x1xf32>
      %c0_27 = arith.constant 0 : index
      %c0_28 = arith.constant 0 : index
      %36 = vector.load %arg4[%c0_27, %c0_28] : memref<4x1xf32, #tpu.memory_space<vmem>>, vector<4x1xf32>
      %37 = arith.minimumf %32, %36 : vector<4x1xf32>
      %c0_29 = arith.constant 0 : index
      %c0_30 = arith.constant 0 : index
      %38 = vector.load %arg6[%c0_29, %c0_30] : memref<4x1xf32, #tpu.memory_space<vmem>>, vector<4x1xf32>
      tpu.vector_store %arg6[%c0_29, %c0_30], %37 {strides = array<i32>} : memref<4x1xf32, #tpu.memory_space<vmem>>, vector<4x1xf32>,
      %c0_31 = arith.constant 0 : index
      %c0_32 = arith.constant 0 : index
      %39 = vector.load %arg5[%c0_31, %c0_32] : memref<4x1xf32, #tpu.memory_space<vmem>>, vector<4x1xf32>
      %40 = arith.maximumf %35, %39 : vector<4x1xf32>
      %c0_33 = arith.constant 0 : index
      %c0_34 = arith.constant 0 : index
      %41 = vector.load %arg7[%c0_33, %c0_34] : memref<4x1xf32, #tpu.memory_space<vmem>>, vector<4x1xf32>
      tpu.vector_store %arg7[%c0_33, %c0_34], %40 {strides = array<i32>} : memref<4x1xf32, #tpu.memory_space<vmem>>, vector<4x1xf32>,
    } else {
    }
    return
  }
  func.func @transform_0(%arg0: i32, %arg1: i32, %arg2: i32) -> (i32, i32, i32) {
    %c0_i32 = arith.constant 0 : i32
    return %arg1, %arg0, %arg2 : i32, i32, i32
  }
  func.func @transform_1(%arg0: i32, %arg1: i32, %arg2: i32) -> (i32, i32) {
    %c0_i32 = arith.constant 0 : i32
    %c0_i32_0 = arith.constant 0 : i32
    return %arg0, %c0_i32 : i32, i32
  }
  func.func @transform_2(%arg0: i32, %arg1: i32, %arg2: i32) -> (i32, i32) {
    %c0_i32 = arith.constant 0 : i32
    %c0_i32_0 = arith.constant 0 : i32
    return %arg0, %c0_i32 : i32, i32
  }
  func.func @transform_3(%arg0: i32, %arg1: i32, %arg2: i32) -> (i32, i32) {
    %c0_i32 = arith.constant 0 : i32
    %c0_i32_0 = arith.constant 0 : i32
    return %arg0, %c0_i32 : i32, i32
  }
  func.func @transform_4(%arg0: i32, %arg1: i32, %arg2: i32) -> (i32, i32) {
    %c0_i32 = arith.constant 0 : i32
    %c0_i32_0 = arith.constant 0 : i32
    return %arg0, %c0_i32 : i32, i32
  }
}

</mosaic_0001>

<llo_original>
// kernel: tpu_custom_call.1
$region0: #{tpu_custom_call.1}
  #allocation0 [shape = 'u32[]', space=smem, size = 0x4, offset = 0x4, fixed_abs, tag = 'smem constant byte address 0x4 - core index']
  #allocation1 [shape = 'u32[144,128]{1,0:T(1,128)}', space=vmem, size = 0x12000, scoped, tag = 'internal scratch']
  #allocation2 [shape = 'f32[4,128]{1,0:T(4,128)}', space=vmem, size = 0x800, scoped, tag = 'scratch operand']
  #allocation3 [shape = 'f32[4,128]{1,0:T(4,128)}', space=vmem, size = 0x800, scoped, tag = 'scratch operand']
  %s0 = inlined_call_operand.hbm [shape: f32[2,4,256], index: 0, kind: input, shape index: {}]
  %s1 = inlined_call_operand.vmem [shape: f32[4,1], index: 1, kind: input, shape index: {}]
  %s2 = inlined_call_operand.vmem [shape: f32[4,1], index: 2, kind: input, shape index: {}]
  %s3 = inlined_call_operand.vmem [shape: f32[4,1], index: 3, kind: output, shape index: {0}]
  %s4 = inlined_call_operand.vmem [shape: f32[4,1], index: 4, kind: output, shape index: {1}]
  %5 = xla_tuple %s3, %s4
  %s6 = sld [smem:[#allocation0]]
  $region42: #{tpu_custom_call.1} parent=0
    _
  %s8 = ssub.s32 1, %s6
  %s9 = scalar_select 0, %s8, %s6
  $region1: #{tpu_custom_call.1} parent=0
    #allocation4 [shape = 'u8[8192]{0}', space=vmem, size = 0x2000, scoped, tag = 'input window, operand 0, single buffered']
    #allocation5 [shape = 's32[1]{0}', space=sflag, size = 0x4, scoped, tag = 'scoped memory for tpu_custom_call.1']
    %10 = vsyncpa [#allocation5], 0
    // Predicated region
    $region2: #{tpu_custom_call.1} parent=1 // pred_check
      _
    $region3: #{tpu_custom_call.1} parent=1 // pred_check_branch
      %12 = sbr.rel (0) target = $region5
    $region4: #{tpu_custom_call.1} parent=1 // pred_region
      %s14 = ssub.s32 256, 256
      %15 = vsyncadd [#allocation5], %s14
      %s16 = sshll.u32 [#allocation4], 4
      %s17 = int_to_ptr.vmem [resolvable:$true] %s16
      %22 = dma.hbm_to_vmem [thread:$0]  %s0, 256, %s17, [#allocation5], 128, 128, 8
    $region5: #{tpu_custom_call.1} parent=1 // pred_fallthru
      _
    // Predicated region
    $region6: #{tpu_custom_call.1} parent=1 // pred_check
      _
    $region7: #{tpu_custom_call.1} parent=1 // pred_check_branch
      %24 = sbr.rel (0) target = $region9
    $region8: #{tpu_custom_call.1} parent=1 // pred_region
      _
    $region9: #{tpu_custom_call.1} parent=1 // pred_fallthru
      _
    // Predicated region
    $region10: #{tpu_custom_call.1} parent=1 // pred_check
      _
    $region11: #{tpu_custom_call.1} parent=1 // pred_check_branch
      %26 = sbr.rel (0) target = $region13
    $region12: #{tpu_custom_call.1} parent=1 // pred_region
      _
    $region13: #{tpu_custom_call.1} parent=1 // pred_fallthru
      _
    // Predicated region
    $region14: #{tpu_custom_call.1} parent=1 // pred_check
      _
    $region15: #{tpu_custom_call.1} parent=1 // pred_check_branch
      %28 = sbr.rel (0) target = $region17
    $region16: #{tpu_custom_call.1} parent=1 // pred_region
      %29 = dma.done [#allocation5], 256
    $region17: #{tpu_custom_call.1} parent=1 // pred_fallthru
      _
    %p30 = scmp.eq.s32.totalorder 0, 0
    %p31 = scmp.eq.s32.totalorder 0, 0
    %p32 = pnand %p30, %p31
    %p33 = pneg %p32
    // Predicated region
    $region18: #{tpu_custom_call.1} parent=1 // pred_check
      _
    $region19: #{tpu_custom_call.1} parent=1 // pred_check_branch
      %35 = sbr.rel (%p32) target = $region21
    $region20: #{tpu_custom_call.1} parent=1 // pred_region
      %36 = vst [vmem:[#allocation2] sm:$0xf] inf
      %37 = vst [vmem:[#allocation3] sm:$0xf] -inf
    $region21: #{tpu_custom_call.1} parent=1 // pred_fallthru
      _
    %v38 = vld [vmem:[#allocation4] sm:$0xf]
    %v39 = vld [vmem:[#allocation4 + $0x4] sm:$0xf]
    %v40 = vmin.f32 %v38, %v39
    %v41 = vmax.f32 %v38, %v39
    %s42 = scalar_lea.vmem [#allocation4], 8
    %v43 = vld [vmem:[%s42] sm:$0xf]
    %v44 = vmin.f32 %v40, %v43
    %v45 = vmax.f32 %v41, %v43
    %v46 = vld [vmem:[%s42 + $0x4] sm:$0xf]
    %v47 = vmin.f32 %v44, %v46
    %v48 = vmax.f32 %v45, %v46
    %v49 = vld [vmem:[#allocation2] sm:$0xf]
    %v50 = vmin.f32 %v49, %v47
    %51 = vst [vmem:[#allocation2] sm:$0xf] %v50
    %v52 = vld [vmem:[#allocation3] sm:$0xf]
    %v53 = vmax.f32 %v52, %v48
    %54 = vst [vmem:[#allocation3] sm:$0xf] %v53
    // Predicated region
    $region22: #{tpu_custom_call.1} parent=1 // pred_check
      _
    $region23: #{tpu_custom_call.1} parent=1 // pred_check_branch
      %56 = sbr.rel (%p32) target = $region25
    $region24: #{tpu_custom_call.1} parent=1 // pred_region
      %v57 = vld [vmem:[#allocation2] sm:$0xf]
      %vm58 = vcmask 1043456
      %v59 = vsel %vm58, %v57, inf
      %60 = vmin.xlane.f32.xlu0 %v59
      %v61 = vpop.xlane.xlu0 %60
      %v62 = vld [vmem:[#allocation3] sm:$0xf]
      %v63 = vsel %vm58, %v62, -inf
      %64 = vmax.xlane.f32.xlu0 %v63
      %v65 = vpop.xlane.xlu0 %64
      %v66 = vld [vmem:[%s1] sm:$0xf]
      %v67 = vmin.f32 %v61, %v66
      %vm68 = vcmask 3072
      %69 = vst.msk [vmem:[%s3] sm:$0xf] %vm68, %v67
      %v70 = vld [vmem:[%s2] sm:$0xf]
      %v71 = vmax.f32 %v65, %v70
      %72 = vst.msk [vmem:[%s4] sm:$0xf] %vm68, %v71
    $region25: #{tpu_custom_call.1} parent=1 // pred_fallthru
      _
    // Predicated region
    $region26: #{tpu_custom_call.1} parent=1 // pred_check
      _
    $region27: #{tpu_custom_call.1} parent=1 // pred_check_branch
      %74 = sbr.rel (0) target = $region29
    $region28: #{tpu_custom_call.1} parent=1 // pred_region
      _
    $region29: #{tpu_custom_call.1} parent=1 // pred_fallthru
      _
    // Predicated region
    $region30: #{tpu_custom_call.1} parent=1 // pred_check
      _
    $region31: #{tpu_custom_call.1} parent=1 // pred_check_branch
      %76 = sbr.rel (0) target = $region33
    $region32: #{tpu_custom_call.1} parent=1 // pred_region
      _
    $region33: #{tpu_custom_call.1} parent=1 // pred_fallthru
      _
    // Predicated region
    $region34: #{tpu_custom_call.1} parent=1 // pred_check
      _
    $region35: #{tpu_custom_call.1} parent=1 // pred_check_branch
      %78 = sbr.rel (0) target = $region37
    $region36: #{tpu_custom_call.1} parent=1 // pred_region
      _
    $region37: #{tpu_custom_call.1} parent=1 // pred_fallthru
      _
    // Predicated region
    $region38: #{tpu_custom_call.1} parent=1 // pred_check
      _
    $region39: #{tpu_custom_call.1} parent=1 // pred_check_branch
      %80 = sbr.rel (0) target = $region41
    $region40: #{tpu_custom_call.1} parent=1 // pred_region
      _
    $region41: #{tpu_custom_call.1} parent=1 // pred_fallthru
      _
    %81 = vsyncpa [#allocation5], 1

</llo_original>
